<compile_context>
chip_gen: v5e
topology: v5e:2x2
jax: 0.10.0
libtpu: 0.0.40
codegen_flags: <defaults>
</compile_context>

<pallas_src>
import jax
import jax.numpy as jnp
from jax.experimental import pallas as pl
from jax.experimental.pallas import tpu as pltpu


def _copy_kernel(x_ref, o_ref):
    # Pure data-movement hot path: copy the current VMEM tile to the output.
    o_ref[...] = x_ref[...]


def _resolve_target_shape(shape, total):
    """Resolve -1 entries exactly like torch.reshape."""
    shape = list(shape)
    if -1 in shape:
        idx = shape.index(-1)
        known = 1
        for i, s in enumerate(shape):
            if i != idx:
                known *= s
        shape[idx] = total // known
    shape = tuple(int(s) for s in shape)
    prod = 1
    for s in shape:
        prod *= s
    assert prod == total, "target shape is incompatible with input size"
    return shape


def pallas_reshape(x, shape):
    """Reproduces torch.reshape(x, shape); the copy is done in a Pallas kernel.

    The kernel always sees a lane-dense 2-D slab; the user-visible shape is
    applied afterwards as metadata-only glue (jnp.reshape).
    """
    total = int(x.size)
    out_shape = _resolve_target_shape(shape, total)

    LANE = 128
    if total % LANE == 0:
        rows = total // LANE
        x2d = jnp.reshape(x, (rows, LANE))  # metadata-only, lane/sublane dense

        # Block sizing: keep each double-buffered block around ~4 MiB so the
        # pipeline stays 2-deep on every generation (well under v7x's 64 MiB
        # VMEM even with both input and output blocks double-buffered).
        bytes_per_row = LANE * x.dtype.itemsize
        max_block_bytes = 4 * 1024 * 1024
        max_rows = max(8, max_block_bytes // bytes_per_row)

        if rows <= max_rows:
            # Small input: a single whole-array block, no grid, one DMA each way.
            out2d = pl.pallas_call(
                _copy_kernel,
                out_shape=jax.ShapeDtypeStruct((rows, LANE), x.dtype),
            )(x2d)
        else:
            # Large input: tile the row (sublane) axis with big, 8-aligned blocks.
            block_rows = max_rows - (max_rows % 8)
            grid = (pl.cdiv(rows, block_rows),)
            out2d = pl.pallas_call(
                _copy_kernel,
                out_shape=jax.ShapeDtypeStruct((rows, LANE), x.dtype),
                grid=grid,
                in_specs=[pl.BlockSpec((block_rows, LANE), lambda i: (i, 0))],
                out_specs=pl.BlockSpec((block_rows, LANE), lambda i: (i, 0)),
                compiler_params=pltpu.CompilerParams(
                    dimension_semantics=("parallel",)
                ),
            )(x2d)
        return jnp.reshape(out2d, out_shape)

    # Fallback (total not a multiple of 128): whole-array single block copy.
    x_flat = jnp.reshape(x, (1, total))
    out_flat = pl.pallas_call(
        _copy_kernel,
        out_shape=jax.ShapeDtypeStruct((1, total), x.dtype),
    )(x_flat)
    return jnp.reshape(out_flat, out_shape)


if __name__ == "__main__":
    key = jax.random.PRNGKey(0)
    # NCHW input, as in PyTorch.
    x = jax.random.normal(key, (2, 4, 16, 16), dtype=jnp.float32)

    target_shape = (2, -1)  # -> (2, 1024), same semantics as torch.reshape
    y = pallas_reshape(x, target_shape)
    y = jax.block_until_ready(y)

    # Correctness check against plain row-major reshape (== torch.reshape).
    ref = jnp.reshape(x, (2, 1024))
    assert y.shape == (2, 1024)
    assert y.dtype == x.dtype
    assert bool(jnp.all(y == ref))

    print("KERNEL_OK")
</pallas_src>

<mosaic_0001>
module attributes {stable_mosaic.version = 11 : i64} {
  func.func @_copy_kernel(%arg0: memref<16x128xf32, #tpu.memory_space<vmem>>, %arg1: memref<16x128xf32, #tpu.memory_space<vmem>>) attributes {dimension_semantics = [], scalar_prefetch = 0 : i64, scratch_operands = 0 : i64, tpu.core_type = #tpu.core_type<tc>} {
    %c0 = arith.constant 0 : index
    %c0_0 = arith.constant 0 : index
    %0 = vector.load %arg0[%c0, %c0_0] : memref<16x128xf32, #tpu.memory_space<vmem>>, vector<16x128xf32>
    %c0_1 = arith.constant 0 : index
    %c0_2 = arith.constant 0 : index
    %1 = vector.load %arg1[%c0_1, %c0_2] : memref<16x128xf32, #tpu.memory_space<vmem>>, vector<16x128xf32>
    tpu.vector_store %arg1[%c0_1, %c0_2], %0 {strides = array<i32>} : memref<16x128xf32, #tpu.memory_space<vmem>>, vector<16x128xf32>,
    return
  }
}

</mosaic_0001>

<llo_original>
// kernel: tpu_custom_call.1
$region0: #{tpu_custom_call.1}
  #allocation0 [shape = 'u32[]', space=smem, size = 0x4, offset = 0x4, fixed_abs, tag = 'smem constant byte address 0x4 - core index']
  #allocation1 [shape = 'u32[72,128]{1,0:T(1,128)}', space=vmem, size = 0x9000, scoped, tag = 'internal scratch']
  %s0 = inlined_call_operand.hbm [shape: f32[16,128], index: 0, kind: input, shape index: {}]
  %s1 = inlined_call_operand.hbm [shape: f32[16,128], index: 1, kind: output, shape index: {}]
  %s2 = sld [smem:[#allocation0]]
  $region18: #{tpu_custom_call.1} parent=0
    _
  %s4 = ssub.s32 1, %s2
  %s5 = scalar_select 0, %s4, %s2
  $region1: #{tpu_custom_call.1} parent=0
    #allocation2 [shape = 'u8[8192]{0}', space=vmem, size = 0x2000, scoped, tag = 'input window, operand 0, single buffered']
    #allocation3 [shape = 's32[1]{0}', space=sflag, size = 0x4, scoped, tag = 'scoped memory for tpu_custom_call.1']
    #allocation4 [shape = 's32[1]{0}', space=sflag, size = 0x4, scoped, tag = 'scoped memory for tpu_custom_call.1']
    #allocation5 [shape = 'u8[8192]{0}', space=vmem, size = 0x2000, scoped, tag = 'output window, operand 0, single buffered']
    %6 = vsyncpa [#allocation3], 0
    %7 = vsyncpa [#allocation4], 0
    // Predicated region
    $region2: #{tpu_custom_call.1} parent=1 // pred_check
      _
    $region3: #{tpu_custom_call.1} parent=1 // pred_check_branch
      %9 = sbr.rel (0) target = $region5
    $region4: #{tpu_custom_call.1} parent=1 // pred_region
      %11 = vsyncadd [#allocation3], 0
      %s12 = sshll.u32 %s0, 4
      %s13 = int_to_ptr.hbm [resolvable:$true] %s12
      %s14 = sshll.u32 [#allocation2], 4
      %s15 = int_to_ptr.vmem [resolvable:$true] %s14
      %20 = dma.hbm_to_vmem [thread:$0]  %s13, 256, %s15, [#allocation3], 128, 128, 8
    $region5: #{tpu_custom_call.1} parent=1 // pred_fallthru
      _
    // Predicated region
    $region6: #{tpu_custom_call.1} parent=1 // pred_check
      _
    $region7: #{tpu_custom_call.1} parent=1 // pred_check_branch
      %22 = sbr.rel (0) target = $region9
    $region8: #{tpu_custom_call.1} parent=1 // pred_region
      %24 = dma.done [#allocation3], 256
    $region9: #{tpu_custom_call.1} parent=1 // pred_fallthru
      _
    %v25 = vld [vmem:[#allocation2] sm:$0xff]
    %v26 = vld [vmem:[#allocation2 + $0x8] sm:$0xff]
    %27 = vst [vmem:[#allocation5] sm:$0xff] %v25
    %28 = vst [vmem:[#allocation5 + $0x8] sm:$0xff] %v26
    // Predicated region
    $region10: #{tpu_custom_call.1} parent=1 // pred_check
      _
    $region11: #{tpu_custom_call.1} parent=1 // pred_check_branch
      %30 = sbr.rel (0) target = $region13
    $region12: #{tpu_custom_call.1} parent=1 // pred_region
      %32 = vsyncadd [#allocation4], 0
      %s33 = sshll.u32 [#allocation5], 4
      %s34 = int_to_ptr.vmem [resolvable:$true] %s33
      %s35 = sshll.u32 %s1, 4
      %s36 = int_to_ptr.hbm [resolvable:$true] %s35
      %41 = dma.vmem_to_hbm [thread:$0]  %s34, 256, %s36, [#allocation4], 128, 128, 8
    $region13: #{tpu_custom_call.1} parent=1 // pred_fallthru
      _
    // Predicated region
    $region14: #{tpu_custom_call.1} parent=1 // pred_check
      _
    $region15: #{tpu_custom_call.1} parent=1 // pred_check_branch
      %43 = sbr.rel (0) target = $region17
    $region16: #{tpu_custom_call.1} parent=1 // pred_region
      %45 = dma.done [#allocation4], 256
    $region17: #{tpu_custom_call.1} parent=1 // pred_fallthru
      _
    %46 = vsyncpa [#allocation3], 1
    %47 = vsyncpa [#allocation4], 1

</llo_original>
